<compile_context>
chip_gen: v7x
topology: tpu7x:2x2x1
jax: 0.10.0
libtpu: 0.0.40
codegen_flags: <defaults>
</compile_context>

<pallas_src>
import jax
import jax.numpy as jnp
from jax.experimental import pallas as pl
from jax.experimental.pallas import tpu as pltpu


def cat_feat_kernel(cdf_ref, logp_ref, u_ref, sample_ref, loglik_ref):
    # cdf_ref, logp_ref: (K,) f32 in SMEM.  u_ref: (TB, N) f32.  sample_ref: (TB, N) i32.
    # loglik_ref: (TB, 1) f32.
    u = u_ref[...]                                    # (TB, N), obs on lanes
    num_cats = cdf_ref.shape[0]
    n_obs = u.shape[1]

    sample = jnp.zeros(u.shape, jnp.int32)
    dlog_acc = jnp.zeros(u.shape, jnp.float32)
    for k in range(num_cats - 1):                     # static unroll; K is small
        m = u >= cdf_ref[k]                           # one compare reused for sample AND logLik
        sample = sample + m.astype(jnp.int32)
        dlog = logp_ref[k + 1] - logp_ref[k]          # scalar (SMEM) delta
        dlog_acc = dlog_acc + jnp.where(m, dlog, 0.0)

    sample_ref[...] = sample
    # sum_o log p[sample[b, o]] = N * log_p[0] + sum_o (telescoped deltas)
    loglik_ref[...] = (jnp.sum(dlog_acc, axis=1, keepdims=True)
                       + jnp.float32(n_obs) * logp_ref[0])


def _pick_batch_tile(batch, num_obs, budget_bytes=8 * 1024 * 1024):
    # Live streaming VMEM per batch row: u (f32) + sample (i32), each double-buffered.
    bytes_per_row = num_obs * 4 * 2 * 2
    rows = max(1, budget_bytes // bytes_per_row)
    if rows >= batch:
        return batch                                  # whole batch in one tile (block == full dims)
    # Tiled case: keep the sublane (8) alignment of the (TB, N) blocks.
    # TODO(synk): for extremely large num_obs, additionally tile the obs axis (needs a logLik accumulator).
    return max(8, (rows // 8) * 8)


def cat_feat_vector_forward(probs_param, u):
    """probs_param: (1, K) f32 raw parameter; u: (B, N) f32 uniform[0,1) noise.

    Returns (sample (B, N, 1) int32, logLik (B,) float32)."""
    B, N = u.shape
    K = probs_param.shape[-1]

    # Hoisted probs-side work (done once, outside the streaming kernel).
    p = jax.nn.softmax(probs_param.astype(jnp.float32), axis=1)[0]        # (K,)
    eps = jnp.finfo(jnp.float32).eps
    cdf = jnp.cumsum(p)                                                    # (K,)
    log_p = jnp.log(jnp.clip(p, eps, 1.0 - eps))                           # (K,) torch-style clamp

    TB = _pick_batch_tile(B, N)
    grid_b = pl.cdiv(B, TB)

    sample, loglik = pl.pallas_call(
        cat_feat_kernel,
        grid=(grid_b,),
        out_shape=(
            jax.ShapeDtypeStruct((B, N), jnp.int32),
            jax.ShapeDtypeStruct((B, 1), jnp.float32),
        ),
        in_specs=[
            pl.BlockSpec(memory_space=pltpu.MemorySpace.SMEM),   # cdf  (K,)
            pl.BlockSpec(memory_space=pltpu.MemorySpace.SMEM),   # log_p (K,)
            pl.BlockSpec((TB, N), lambda b: (b, 0)),             # u tile
        ],
        out_specs=(
            pl.BlockSpec((TB, N), lambda b: (b, 0)),             # sample tile
            pl.BlockSpec((TB, 1), lambda b: (b, 0)),             # per-batch logLik
        ),
        compiler_params=pltpu.CompilerParams(
            dimension_semantics=("parallel",),
        ),
    )(cdf, log_p, u)

    return sample[:, :, None], loglik[:, 0]


if __name__ == "__main__":
    # Module config (small, consistent with __init__(batch_size, num_obs, num_cats)).
    batch_size, num_obs, num_cats = 2, 8, 4

    key = jax.random.PRNGKey(0)
    k_probs, k_noise = jax.random.split(key)

    # Parameter init: uniform(0, 1) of shape (1, num_cats), as in nn.init.uniform_.
    probs_param = jax.random.uniform(k_probs, (1, num_cats), dtype=jnp.float32)
    # Uniform noise driving the categorical sampling (glue; hot path is in-kernel).
    u = jax.random.uniform(k_noise, (batch_size, num_obs), dtype=jnp.float32)

    sample, loglik = cat_feat_vector_forward(probs_param, u)
    jax.block_until_ready((sample, loglik))

    # Pure-JAX reference (inverse-CDF sampling with the same uniforms, gathered log-probs).
    p = jax.nn.softmax(probs_param, axis=1)[0]
    cdf = jnp.cumsum(p)
    eps = jnp.finfo(jnp.float32).eps
    log_p = jnp.log(jnp.clip(p, eps, 1.0 - eps))
    ref_sample = jnp.sum(
        (u[:, :, None] >= cdf[None, None, : num_cats - 1]).astype(jnp.int32), axis=-1
    )
    ref_loglik = jnp.sum(log_p[ref_sample], axis=1)

    assert sample.shape == (batch_size, num_obs, 1)
    assert loglik.shape == (batch_size,)
    assert bool(jnp.all((sample >= 0) & (sample < num_cats)))
    assert jnp.array_equal(sample[:, :, 0], ref_sample)
    assert jnp.allclose(loglik, ref_loglik, rtol=1e-5, atol=1e-5)

    print("KERNEL_OK")
</pallas_src>

<mosaic_0001>
module attributes {stable_mosaic.version = 11 : i64} {
  func.func @cat_feat_kernel(%arg0: i32, %arg1: memref<4xf32, #tpu.memory_space<smem>>, %arg2: memref<4xf32, #tpu.memory_space<smem>>, %arg3: memref<2x8xf32, #tpu.memory_space<vmem>>, %arg4: memref<2x8xi32, #tpu.memory_space<vmem>>, %arg5: memref<2x1xf32, #tpu.memory_space<vmem>>) attributes {dimension_semantics = [#tpu.dimension_semantics<parallel>], iteration_bounds = array<i64: 1>, scalar_prefetch = 0 : i64, scratch_operands = 0 : i64, tpu.core_type = #tpu.core_type<tc>, window_params = [{transform_indices = @transform_0, window_bounds = array<i64: 4>}, {transform_indices = @transform_1, window_bounds = array<i64: 4>}, {transform_indices = @transform_2, window_bounds = array<i64: 2, 8>}, {transform_indices = @transform_3, window_bounds = array<i64: 2, 8>}, {transform_indices = @transform_4, window_bounds = array<i64: 2, 1>}]} {
    %c0 = arith.constant 0 : index
    %c0_0 = arith.constant 0 : index
    %0 = vector.load %arg3[%c0, %c0_0] : memref<2x8xf32, #tpu.memory_space<vmem>>, vector<2x8xf32>
    %c0_i32 = arith.constant 0 : i32
    %1 = vector.broadcast %c0_i32 : i32 to vector<2x8xi32>
    %cst = arith.constant 0.000000e+00 : f32
    %2 = vector.broadcast %cst : f32 to vector<2x8xf32>
    %c0_1 = arith.constant 0 : index
    %3 = memref.load %arg1[%c0_1] : memref<4xf32, #tpu.memory_space<smem>>
    %4 = vector.broadcast %3 : f32 to vector<2x8xf32>
    %5 = arith.cmpf oge, %0, %4 : vector<2x8xf32>
    %6 = arith.extui %5 : vector<2x8xi1> to vector<2x8xi32>
    %7 = arith.addi %1, %6 : vector<2x8xi32>
    %c1 = arith.constant 1 : index
    %8 = memref.load %arg2[%c1] : memref<4xf32, #tpu.memory_space<smem>>
    %c0_2 = arith.constant 0 : index
    %9 = memref.load %arg2[%c0_2] : memref<4xf32, #tpu.memory_space<smem>>
    %10 = arith.subf %8, %9 : f32
    %cst_3 = arith.constant 0.000000e+00 : f32
    %11 = vector.broadcast %10 : f32 to vector<2x8xf32>
    %12 = vector.broadcast %cst_3 : f32 to vector<2x8xf32>
    %13 = arith.select %5, %11, %12 : vector<2x8xi1>, vector<2x8xf32>
    %14 = arith.addf %2, %13 : vector<2x8xf32>
    %c1_4 = arith.constant 1 : index
    %15 = memref.load %arg1[%c1_4] : memref<4xf32, #tpu.memory_space<smem>>
    %16 = vector.broadcast %15 : f32 to vector<2x8xf32>
    %17 = arith.cmpf oge, %0, %16 : vector<2x8xf32>
    %18 = arith.extui %17 : vector<2x8xi1> to vector<2x8xi32>
    %19 = arith.addi %7, %18 : vector<2x8xi32>
    %c2 = arith.constant 2 : index
    %20 = memref.load %arg2[%c2] : memref<4xf32, #tpu.memory_space<smem>>
    %c1_5 = arith.constant 1 : index
    %21 = memref.load %arg2[%c1_5] : memref<4xf32, #tpu.memory_space<smem>>
    %22 = arith.subf %20, %21 : f32
    %cst_6 = arith.constant 0.000000e+00 : f32
    %23 = vector.broadcast %22 : f32 to vector<2x8xf32>
    %24 = vector.broadcast %cst_6 : f32 to vector<2x8xf32>
    %25 = arith.select %17, %23, %24 : vector<2x8xi1>, vector<2x8xf32>
    %26 = arith.addf %14, %25 : vector<2x8xf32>
    %c2_7 = arith.constant 2 : index
    %27 = memref.load %arg1[%c2_7] : memref<4xf32, #tpu.memory_space<smem>>
    %28 = vector.broadcast %27 : f32 to vector<2x8xf32>
    %29 = arith.cmpf oge, %0, %28 : vector<2x8xf32>
    %30 = arith.extui %29 : vector<2x8xi1> to vector<2x8xi32>
    %31 = arith.addi %19, %30 : vector<2x8xi32>
    %c3 = arith.constant 3 : index
    %32 = memref.load %arg2[%c3] : memref<4xf32, #tpu.memory_space<smem>>
    %c2_8 = arith.constant 2 : index
    %33 = memref.load %arg2[%c2_8] : memref<4xf32, #tpu.memory_space<smem>>
    %34 = arith.subf %32, %33 : f32
    %cst_9 = arith.constant 0.000000e+00 : f32
    %35 = vector.broadcast %34 : f32 to vector<2x8xf32>
    %36 = vector.broadcast %cst_9 : f32 to vector<2x8xf32>
    %37 = arith.select %29, %35, %36 : vector<2x8xi1>, vector<2x8xf32>
    %38 = arith.addf %26, %37 : vector<2x8xf32>
    %c0_10 = arith.constant 0 : index
    %c0_11 = arith.constant 0 : index
    %39 = vector.load %arg4[%c0_10, %c0_11] : memref<2x8xi32, #tpu.memory_space<vmem>>, vector<2x8xi32>
    tpu.vector_store %arg4[%c0_10, %c0_11], %31 {strides = array<i32>} : memref<2x8xi32, #tpu.memory_space<vmem>>, vector<2x8xi32>,
    %cst_12 = arith.constant dense<0.000000e+00> : vector<2xf32>
    %40 = vector.multi_reduction <add>, %38, %cst_12 [1] : vector<2x8xf32> to vector<2xf32>
    %41 = vector.shape_cast %40 : vector<2xf32> to vector<2x1xf32>
    %c0_13 = arith.constant 0 : index
    %42 = memref.load %arg2[%c0_13] : memref<4xf32, #tpu.memory_space<smem>>
    %cst_14 = arith.constant 8.000000e+00 : f32
    %43 = arith.mulf %cst_14, %42 : f32
    %44 = vector.broadcast %43 : f32 to vector<2x1xf32>
    %45 = arith.addf %41, %44 : vector<2x1xf32>
    %c0_15 = arith.constant 0 : index
    %c0_16 = arith.constant 0 : index
    %46 = vector.load %arg5[%c0_15, %c0_16] : memref<2x1xf32, #tpu.memory_space<vmem>>, vector<2x1xf32>
    tpu.vector_store %arg5[%c0_15, %c0_16], %45 {strides = array<i32>} : memref<2x1xf32, #tpu.memory_space<vmem>>, vector<2x1xf32>,
    return
  }
  func.func @transform_0(%arg0: i32) -> i32 {
    %c0_i32 = arith.constant 0 : i32
    %c0_i32_0 = arith.constant 0 : i32
    return %c0_i32 : i32
  }
  func.func @transform_1(%arg0: i32) -> i32 {
    %c0_i32 = arith.constant 0 : i32
    %c0_i32_0 = arith.constant 0 : i32
    return %c0_i32 : i32
  }
  func.func @transform_2(%arg0: i32) -> (i32, i32) {
    %c0_i32 = arith.constant 0 : i32
    %c0_i32_0 = arith.constant 0 : i32
    return %arg0, %c0_i32 : i32, i32
  }
  func.func @transform_3(%arg0: i32) -> (i32, i32) {
    %c0_i32 = arith.constant 0 : i32
    %c0_i32_0 = arith.constant 0 : i32
    return %arg0, %c0_i32 : i32, i32
  }
  func.func @transform_4(%arg0: i32) -> (i32, i32) {
    %c0_i32 = arith.constant 0 : i32
    %c0_i32_0 = arith.constant 0 : i32
    return %arg0, %c0_i32 : i32, i32
  }
}

</mosaic_0001>

<llo_original>
// kernel: tpu_custom_call.1
$region0: #{tpu_custom_call.1}
  #allocation0 [shape = 'u32[]', space=smem, size = 0x4, offset = 0x4, fixed_abs, tag = 'smem constant byte address 0x4 - core index']
  #allocation1 [shape = 'u32[144,128]{1,0:T(1,128)}', space=vmem, size = 0x12000, scoped, tag = 'internal scratch']
  %s0 = inlined_call_operand.hbm [shape: f32[4], index: 0, kind: input, shape index: {}]
  %s1 = inlined_call_operand.vmem [shape: f32[4], index: 1, kind: input, shape index: {}]
  %s2 = inlined_call_operand.vmem [shape: f32[2,8], index: 2, kind: input, shape index: {}]
  %s3 = inlined_call_operand.hbm [shape: s32[2,8], index: 3, kind: output, shape index: {0}]
  %s4 = inlined_call_operand.vmem [shape: f32[2,1], index: 4, kind: output, shape index: {1}]
  %5 = xla_tuple %s3, %s4
  %s6 = sld [smem:[#allocation0]]
  $region38: #{tpu_custom_call.1} parent=0
    _
  %s8 = ssub.s32 1, %s6
  %s9 = scalar_select 0, %s8, %s6
  $region1: #{tpu_custom_call.1} parent=0
    #allocation2 [shape = 'u8[512]{0}', space=smem, size = 0x200, scoped, tag = 'input window, operand 0, single buffered']
    #allocation3 [shape = 's32[1]{0}', space=sflag, size = 0x4, scoped, tag = 'scoped memory for tpu_custom_call.1']
    #allocation4 [shape = 's32[1]{0}', space=sflag, size = 0x4, scoped, tag = 'scoped memory for tpu_custom_call.1']
    #allocation5 [shape = 's32[1]{0}', space=sflag, size = 0x4, scoped, tag = 'scoped memory for tpu_custom_call.1']
    #allocation6 [shape = 'u8[512]{0}', space=smem, size = 0x200, scoped, tag = 'input window, operand 1, single buffered']
    #allocation7 [shape = 'u8[1024]{0}', space=vmem, size = 0x400, scoped, tag = 'output window, operand 0, single buffered']
    %10 = vsyncpa [#allocation4], 0
    %11 = vsyncpa [#allocation5], 0
    %12 = vsyncpa [#allocation3], 0
    // Predicated region
    $region2: #{tpu_custom_call.1} parent=1 // pred_check
      _
    $region3: #{tpu_custom_call.1} parent=1 // pred_check_branch
      %14 = sbr.rel (0) target = $region5
    $region4: #{tpu_custom_call.1} parent=1 // pred_region
      %s16 = ssub.s32 16, 16
      %17 = vsyncadd [#allocation4], %s16
      %20 = dma.hbm_to_smem %s0, 16, [#allocation2], [#allocation4]
    $region5: #{tpu_custom_call.1} parent=1 // pred_fallthru
      _
    // Predicated region
    $region6: #{tpu_custom_call.1} parent=1 // pred_check
      _
    $region7: #{tpu_custom_call.1} parent=1 // pred_check_branch
      %22 = sbr.rel (0) target = $region9
    $region8: #{tpu_custom_call.1} parent=1 // pred_region
      %s24 = ssub.s32 16, 16
      %25 = vsyncadd [#allocation5], %s24
      %s27 = sshll.u32 %s1, 4
      %s28 = int_to_ptr.vmem [resolvable:$true] %s27
      %30 = dma.vmem_to_smem %s28, 16, [#allocation6], [#allocation5]
    $region9: #{tpu_custom_call.1} parent=1 // pred_fallthru
      _
    // Predicated region
    $region10: #{tpu_custom_call.1} parent=1 // pred_check
      _
    $region11: #{tpu_custom_call.1} parent=1 // pred_check_branch
      %32 = sbr.rel (0) target = $region13
    $region12: #{tpu_custom_call.1} parent=1 // pred_region
      _
    $region13: #{tpu_custom_call.1} parent=1 // pred_fallthru
      _
    // Predicated region
    $region14: #{tpu_custom_call.1} parent=1 // pred_check
      _
    $region15: #{tpu_custom_call.1} parent=1 // pred_check_branch
      %34 = sbr.rel (0) target = $region17
    $region16: #{tpu_custom_call.1} parent=1 // pred_region
      %35 = dma.done [#allocation4], 16
    $region17: #{tpu_custom_call.1} parent=1 // pred_fallthru
      _
    // Predicated region
    $region18: #{tpu_custom_call.1} parent=1 // pred_check
      _
    $region19: #{tpu_custom_call.1} parent=1 // pred_check_branch
      %37 = sbr.rel (0) target = $region21
    $region20: #{tpu_custom_call.1} parent=1 // pred_region
      %38 = dma.done [#allocation5], 16
    $region21: #{tpu_custom_call.1} parent=1 // pred_fallthru
      _
    %39 = sfence
    %v40 = vld [vmem:[%s2] sm:$0x3]
    %s41 = sld [smem:[#allocation2]]
    %v42 = vstv %s41
    %vm43 = vcmp.ge.f32.partialorder %v40, %v42
    %v44 = vsel %vm43, 1, 0
    %s45 = sld [smem:[#allocation6 + $0x1]]
    %s46 = sld [smem:[#allocation6]]
    %s47 = ssub.f32 %s45, %s46
    %v48 = vstv %s47
    %v49 = vsel %vm43, %v48, 0.0
    %v50 = vadd.f32 %v49, 0.0
    %s51 = sld [smem:[#allocation2 + $0x1]]
    %v52 = vstv %s51
    %vm53 = vcmp.ge.f32.partialorder %v40, %v52
    %v54 = vsel %vm53, 1, 0
    %v55 = vadd.s32 %v44, %v54
    %s56 = sld [smem:[#allocation6 + $0x2]]
    %s57 = ssub.f32 %s56, %s45
    %v58 = vstv %s57
    %v59 = vsel %vm53, %v58, 0.0
    %v60 = vadd.f32 %v50, %v59
    %s61 = sld [smem:[#allocation2 + $0x2]]
    %v62 = vstv %s61
    %vm63 = vcmp.ge.f32.partialorder %v40, %v62
    %v64 = vsel %vm63, 1, 0
    %v65 = vadd.s32 %v55, %v64
    %s66 = sld [smem:[#allocation6 + $0x3]]
    %s67 = ssub.f32 %s66, %s56
    %v68 = vstv %s67
    %v69 = vsel %vm63, %v68, 0.0
    %v70 = vadd.f32 %v60, %v69
    %vm71 = vcmask 58368
    %72 = vst.msk [vmem:[#allocation7] sm:$0x3] %vm71, %v65
    %v73 = vsel %vm71, %v70, 0.0
    %74 = vadd.xlane.f32.xlu0 %v73
    %v75 = vpop.xlane.xlu0 %74
    %s76 = sld [smem:[#allocation6]]
    %s77 = smul.f32 %s76, 8.0
    %v78 = vstv %s77
    %v79 = vadd.f32 %v75, %v78
    %vm80 = vcmask 1024
    %81 = vst.msk [vmem:[%s4] sm:$0x3] %vm80, %v79
    // Predicated region
    $region22: #{tpu_custom_call.1} parent=1 // pred_check
      _
    $region23: #{tpu_custom_call.1} parent=1 // pred_check_branch
      %83 = sbr.rel (0) target = $region25
    $region24: #{tpu_custom_call.1} parent=1 // pred_region
      %s85 = ssub.s32 32, 32
      %86 = vsyncadd [#allocation3], %s85
      %s88 = sshll.u32 [#allocation7], 4
      %s89 = int_to_ptr.vmem [resolvable:$true] %s88
      %91 = dma.vmem_to_hbm [thread:$0]  %s89, 32, %s3, [#allocation3]
    $region25: #{tpu_custom_call.1} parent=1 // pred_fallthru
      _
    // Predicated region
    $region26: #{tpu_custom_call.1} parent=1 // pred_check
      _
    $region27: #{tpu_custom_call.1} parent=1 // pred_check_branch
      %93 = sbr.rel (0) target = $region29
    $region28: #{tpu_custom_call.1} parent=1 // pred_region
      _
    $region29: #{tpu_custom_call.1} parent=1 // pred_fallthru
      _
    // Predicated region
    $region30: #{tpu_custom_call.1} parent=1 // pred_check
      _
    $region31: #{tpu_custom_call.1} parent=1 // pred_check_branch
      %95 = sbr.rel (0) target = $region33
    $region32: #{tpu_custom_call.1} parent=1 // pred_region
      %96 = dma.done [#allocation3], 32
    $region33: #{tpu_custom_call.1} parent=1 // pred_fallthru
      _
    // Predicated region
    $region34: #{tpu_custom_call.1} parent=1 // pred_check
      _
    $region35: #{tpu_custom_call.1} parent=1 // pred_check_branch
      %98 = sbr.rel (0) target = $region37
    $region36: #{tpu_custom_call.1} parent=1 // pred_region
      _
    $region37: #{tpu_custom_call.1} parent=1 // pred_fallthru
      _
    %99 = vsyncpa [#allocation3], 1
    %100 = vsyncpa [#allocation4], 1
    %101 = vsyncpa [#allocation5], 1

</llo_original>
